<compile_context>
chip_gen: v7x
topology: tpu7x:2x2x1
jax: 0.10.0
libtpu: 0.0.40
codegen_flags: <defaults>
</compile_context>

<pallas_src>
import functools

import jax
import jax.numpy as jnp
from jax.experimental import pallas as pl
from jax.experimental.pallas import tpu as pltpu


def _embed_dropout_kernel(seed_ref, ids_ref, table_ref, out_ref, *,
                          drop_rate, tile_n):
    tag_len = table_ref.shape[0]
    tag_dim = table_ref.shape[1]

    # ---- embedding gather as one-hot matmul (MXU) ----
    ids = ids_ref[...]                                            # (tile_n, 1) int32
    lane_iota = jax.lax.broadcasted_iota(jnp.int32, (tile_n, tag_len), 1)
    onehot = (ids == lane_iota).astype(jnp.float32)               # (tile_n, tag_len)
    emb = jnp.dot(onehot, table_ref[...],
                  preferred_element_type=jnp.float32)             # (tile_n, tag_dim)
    # padding_idx=0: row 0 of the table is zeroed in the wrapper, so index 0
    # (and any out-of-range index, which yields an all-zero one-hot row) maps
    # to the zero vector.

    # ---- dropout (inverted, train mode) ----
    if drop_rate > 0.0:
        seed = seed_ref[0].astype(jnp.uint32)
        base_row = pl.program_id(0) * tile_n
        row = jax.lax.broadcasted_iota(jnp.int32, (tile_n, tag_dim), 0) + base_row
        col = jax.lax.broadcasted_iota(jnp.int32, (tile_n, tag_dim), 1)
        # Counter-based hash PRNG: murmur3-style finalizer over the global
        # element index mixed with the seed.  Pure VPU integer ops -> lowers on
        # real TPU and in the CPU/interpret fallback alike.
        x = (row * tag_dim + col).astype(jnp.uint32)
        x = x ^ (seed * jnp.uint32(0x9E3779B1))
        x = x ^ (x >> 16)
        x = x * jnp.uint32(0x85EBCA6B)
        x = x ^ (x >> 13)
        x = x * jnp.uint32(0xC2B2AE35)
        x = x ^ (x >> 16)
        # Integer-threshold keep mask in a 24-bit domain (no int->f32 convert).
        r24 = (x >> 8).astype(jnp.int32)                          # uniform [0, 2^24)
        threshold = jnp.int32(int(round(float(drop_rate) * float(1 << 24))))
        keep = r24 >= threshold
        scale = jnp.float32(1.0 / (1.0 - float(drop_rate)))
        emb = jnp.where(keep, emb * scale, jnp.float32(0.0))

    out_ref[...] = emb.astype(out_ref.dtype)


def sent_tag_embeddings(pos_seq, table, *, drop_rate, seed, tile_n=1024):
    """pos_seq: (B, S) int indices; table: (tag_len, tag_dim) f32.

    Returns (B, S, tag_dim) f32, equivalent to
    nn.Dropout(drop_rate)(nn.Embedding(tag_len, tag_dim, padding_idx=0)(pos_seq))
    in training mode (use drop_rate=0.0 for eval mode).
    """
    assert 0.0 <= float(drop_rate) < 1.0, "drop_rate must be in [0, 1)"
    B, S = pos_seq.shape
    tag_len, tag_dim = table.shape
    N = B * S

    # Enforce padding_idx=0 semantics regardless of the incoming parameter.
    table = table.at[0].set(0.0)

    # Large tiles amortize per-grid-step overhead on this mem-bound kernel, but
    # never exceed the (8-rounded) data size; keep a multiple of 8 sublanes.
    tile = min(int(tile_n), ((N + 7) // 8) * 8)
    tile = max(8, ((tile + 7) // 8) * 8)
    n_pad = (-N) % tile
    N_p = N + n_pad

    ids = jnp.reshape(pos_seq.astype(jnp.int32), (N, 1))
    if n_pad:
        ids = jnp.pad(ids, ((0, n_pad), (0, 0)))

    seed_arr = jnp.array([seed], dtype=jnp.int32)

    kernel = functools.partial(_embed_dropout_kernel,
                               drop_rate=float(drop_rate), tile_n=tile)

    cost = pl.CostEstimate(
        flops=2 * N_p * tag_len * tag_dim,
        transcendentals=0,
        bytes_accessed=4 * (N_p + N_p * tag_dim + tag_len * tag_dim),
    )

    out = pl.pallas_call(
        kernel,
        out_shape=jax.ShapeDtypeStruct((N_p, tag_dim), jnp.float32),
        grid_spec=pltpu.PrefetchScalarGridSpec(
            num_scalar_prefetch=1,
            grid=(N_p // tile,),
            in_specs=[
                pl.BlockSpec((tile, 1), lambda i, seed: (i, 0)),
                pl.BlockSpec((tag_len, tag_dim), lambda i, seed: (0, 0)),
            ],
            out_specs=pl.BlockSpec((tile, tag_dim), lambda i, seed: (i, 0)),
        ),
        compiler_params=pltpu.CompilerParams(
            dimension_semantics=("parallel",)),  # grid steps are independent
        cost_estimate=cost,
    )(seed_arr, ids, table)

    if n_pad:
        out = out[:N]  # only materializes an extra copy when padding was needed
    return out.reshape(B, S, tag_dim)


if __name__ == "__main__":
    # Module hyper-params (deterministic, synthetic).
    TAG_LEN = 16     # vocabulary of tags
    TAG_DIM = 128    # embedding dim (lane-dense)
    DROP_RATE = 0.1
    B, S = 2, 8

    key = jax.random.PRNGKey(0)
    k_tab, k_ids = jax.random.split(key)

    # nn.Embedding-style init: N(0,1); padding row is zeroed inside the wrapper.
    table = jax.random.normal(k_tab, (TAG_LEN, TAG_DIM), dtype=jnp.float32)

    # Tag index sequence, including some padding (0) positions.
    pos_seq = jax.random.randint(k_ids, (B, S), minval=0, maxval=TAG_LEN,
                                 dtype=jnp.int32)

    out = sent_tag_embeddings(pos_seq, table, drop_rate=DROP_RATE, seed=1234)
    out = jax.block_until_ready(out)

    assert out.shape == (B, S, TAG_DIM), out.shape
    print("KERNEL_OK")
</pallas_src>

<mosaic_0001>
module attributes {stable_mosaic.version = 11 : i64} {
  func.func @_embed_dropout_kernel(%arg0: i32, %arg1: memref<1xi32, #tpu.memory_space<smem>>, %arg2: memref<16x1xi32, #tpu.memory_space<vmem>>, %arg3: memref<16x128xf32, #tpu.memory_space<vmem>>, %arg4: memref<16x128xf32, #tpu.memory_space<vmem>>) attributes {dimension_semantics = [#tpu.dimension_semantics<parallel>], iteration_bounds = array<i64: 1>, scalar_prefetch = 1 : i64, scratch_operands = 0 : i64, tpu.core_type = #tpu.core_type<tc>, window_params = [{transform_indices = @transform_0, window_bounds = array<i64: 16, 1>}, {pipeline_mode = #tpu.pipeline_mode<synchronous>, transform_indices = @transform_1, window_bounds = array<i64: 16, 128>}, {transform_indices = @transform_2, window_bounds = array<i64: 16, 128>}]} {
    %c0 = arith.constant 0 : index
    %c0_0 = arith.constant 0 : index
    %0 = vector.load %arg2[%c0, %c0_0] : memref<16x1xi32, #tpu.memory_space<vmem>>, vector<16x1xi32>
    %1 = tpu.iota {dimensions = array<i32: 1>} : vector<16x16xi32>
    %2 = vector.broadcast %0 : vector<16x1xi32> to vector<16x16xi32>
    %3 = arith.cmpi eq, %2, %1 : vector<16x16xi32>
    %4 = arith.extui %3 : vector<16x16xi1> to vector<16x16xi32>
    %5 = arith.sitofp %4 : vector<16x16xi32> to vector<16x16xf32>
    %c0_1 = arith.constant 0 : index
    %c0_2 = arith.constant 0 : index
    %6 = vector.load %arg3[%c0_1, %c0_2] : memref<16x128xf32, #tpu.memory_space<vmem>>, vector<16x128xf32>
    %cst = arith.constant dense<0.000000e+00> : vector<16x128xf32>
    %7 = tpu.matmul %5, %6, %cst {dimension_numbers = #tpu.dot_dimension_numbers<[1], [0], [0], [1], [0, 0, 1, 1], [], []>} : vector<16x16xf32>, vector<16x128xf32>, vector<16x128xf32> -> vector<16x128xf32>
    %c0_3 = arith.constant 0 : index
    %8 = memref.load %arg1[%c0_3] : memref<1xi32, #tpu.memory_space<smem>>
    %c16_i32 = arith.constant 16 : i32
    %9 = arith.muli %arg0, %c16_i32 : i32
    %10 = tpu.iota {dimensions = array<i32: 0>} : vector<16x128xi32>
    %11 = vector.broadcast %9 : i32 to vector<16x128xi32>
    %12 = arith.addi %10, %11 : vector<16x128xi32>
    %13 = tpu.iota {dimensions = array<i32: 1>} : vector<16x128xi32>
    %c128_i32 = arith.constant 128 : i32
    %14 = vector.broadcast %c128_i32 : i32 to vector<16x128xi32>
    %15 = arith.muli %12, %14 : vector<16x128xi32>
    %16 = arith.addi %15, %13 : vector<16x128xi32>
    %c-1640531535_i32 = arith.constant -1640531535 : i32
    %17 = arith.muli %8, %c-1640531535_i32 : i32
    %18 = vector.broadcast %17 : i32 to vector<16x128xi32>
    %19 = arith.xori %16, %18 : vector<16x128xi32>
    %c16_i32_4 = arith.constant 16 : i32
    %20 = vector.broadcast %c16_i32_4 : i32 to vector<16x128xi32>
    %21 = arith.shrui %19, %20 : vector<16x128xi32>
    %22 = arith.xori %19, %21 : vector<16x128xi32>
    %c-2048144789_i32 = arith.constant -2048144789 : i32
    %23 = vector.broadcast %c-2048144789_i32 : i32 to vector<16x128xi32>
    %24 = arith.muli %22, %23 : vector<16x128xi32>
    %c13_i32 = arith.constant 13 : i32
    %25 = vector.broadcast %c13_i32 : i32 to vector<16x128xi32>
    %26 = arith.shrui %24, %25 : vector<16x128xi32>
    %27 = arith.xori %24, %26 : vector<16x128xi32>
    %c-1028477387_i32 = arith.constant -1028477387 : i32
    %28 = vector.broadcast %c-1028477387_i32 : i32 to vector<16x128xi32>
    %29 = arith.muli %27, %28 : vector<16x128xi32>
    %c16_i32_5 = arith.constant 16 : i32
    %30 = vector.broadcast %c16_i32_5 : i32 to vector<16x128xi32>
    %31 = arith.shrui %29, %30 : vector<16x128xi32>
    %32 = arith.xori %29, %31 : vector<16x128xi32>
    %c8_i32 = arith.constant 8 : i32
    %33 = vector.broadcast %c8_i32 : i32 to vector<16x128xi32>
    %34 = arith.shrui %32, %33 : vector<16x128xi32>
    %c1677722_i32 = arith.constant 1677722 : i32
    %35 = vector.broadcast %c1677722_i32 : i32 to vector<16x128xi32>
    %36 = arith.cmpi sge, %34, %35 : vector<16x128xi32>
    %cst_6 = arith.constant 1.11111116 : f32
    %37 = vector.broadcast %cst_6 : f32 to vector<16x128xf32>
    %38 = arith.mulf %7, %37 : vector<16x128xf32>
    %cst_7 = arith.constant 0.000000e+00 : f32
    %39 = vector.broadcast %cst_7 : f32 to vector<16x128xf32>
    %40 = arith.select %36, %38, %39 : vector<16x128xi1>, vector<16x128xf32>
    %c0_8 = arith.constant 0 : index
    %c0_9 = arith.constant 0 : index
    %41 = vector.load %arg4[%c0_8, %c0_9] : memref<16x128xf32, #tpu.memory_space<vmem>>, vector<16x128xf32>
    tpu.vector_store %arg4[%c0_8, %c0_9], %40 {strides = array<i32>} : memref<16x128xf32, #tpu.memory_space<vmem>>, vector<16x128xf32>,
    return
  }
  func.func @transform_0(%arg0: i32, %arg1: memref<1xi32, #tpu.memory_space<smem>>) -> (i32, i32) {
    %c0_i32 = arith.constant 0 : i32
    %c0_i32_0 = arith.constant 0 : i32
    return %arg0, %c0_i32 : i32, i32
  }
  func.func @transform_1(%arg0: i32, %arg1: memref<1xi32, #tpu.memory_space<smem>>) -> (i32, i32) {
    %c0_i32 = arith.constant 0 : i32
    %c0_i32_0 = arith.constant 0 : i32
    %c0_i32_1 = arith.constant 0 : i32
    return %c0_i32, %c0_i32_0 : i32, i32
  }
  func.func @transform_2(%arg0: i32, %arg1: memref<1xi32, #tpu.memory_space<smem>>) -> (i32, i32) {
    %c0_i32 = arith.constant 0 : i32
    %c0_i32_0 = arith.constant 0 : i32
    return %arg0, %c0_i32 : i32, i32
  }
}

</mosaic_0001>

<llo_original>
// kernel: tpu_custom_call.1
$region0: #{tpu_custom_call.1}
  #allocation0 [shape = 'u32[]', space=smem, size = 0x4, offset = 0x4, fixed_abs, tag = 'smem constant byte address 0x4 - core index']
  #allocation1 [shape = 'u32[144,128]{1,0:T(1,128)}', space=vmem, size = 0x12000, scoped, tag = 'internal scratch']
  #allocation2 [shape = 's32[1]{0}', space=sflag, size = 0x4, scoped, tag = 'scoped memory for tpu_custom_call.1']
  #allocation3 [shape = 's32[1]{0:T(128)S(6)}', space=smem, size = 0x200, scoped, tag = 'prefetched SMEM operand 0']
  %s0 = inlined_call_operand.<no memory space> [shape: s32[1], index: 0, kind: input, shape index: {}]
  %s1 = inlined_call_operand.vmem [shape: s32[16,1], index: 1, kind: input, shape index: {}]
  %s2 = inlined_call_operand.vmem [shape: f32[16,128], index: 2, kind: input, shape index: {}]
  %s3 = inlined_call_operand.hbm [shape: f32[16,128], index: 3, kind: output, shape index: {}]
  %s4 = sld [smem:[#allocation0]]
  $region18: #{tpu_custom_call.1} parent=0
    _
  %s6 = ssub.s32 1, %s4
  %s7 = scalar_select 0, %s6, %s4
  %8 = sst [smem:[#allocation3]] %s0
  $region1: #{tpu_custom_call.1} parent=0
    #allocation4 [shape = 'u8[8192]{0}', space=vmem, size = 0x2000, scoped, tag = 'output window, operand 0, single buffered']
    #allocation5 [shape = 's32[1]{0}', space=sflag, size = 0x4, scoped, tag = 'scoped memory for tpu_custom_call.1']
    %9 = vsyncpa [#allocation5], 0
    // Predicated region
    $region2: #{tpu_custom_call.1} parent=1 // pred_check
      _
    $region3: #{tpu_custom_call.1} parent=1 // pred_check_branch
      %11 = sbr.rel (0) target = $region5
    $region4: #{tpu_custom_call.1} parent=1 // pred_region
      _
    $region5: #{tpu_custom_call.1} parent=1 // pred_fallthru
      _
    // Predicated region
    $region6: #{tpu_custom_call.1} parent=1 // pred_check
      _
    $region7: #{tpu_custom_call.1} parent=1 // pred_check_branch
      %13 = sbr.rel (0) target = $region9
    $region8: #{tpu_custom_call.1} parent=1 // pred_region
      _
    $region9: #{tpu_custom_call.1} parent=1 // pred_fallthru
      _
    %v14 = vld [vmem:[%s1] sm:$0xff]
    %v15 = vld [vmem:[%s1 + $0x8] sm:$0xff]
    %v16 = vlaneseq
    %v17 = vand.u32 %v16, 127
    %18 = vset.pattern.permute.xlu0 0
    %19 = vperm.xlu0 %18, %v14
    %v20 = vpop.permute.xlu0 %19
    %21 = vset.pattern.permute.xlu0 0
    %22 = vperm.xlu0 %21, %v15
    %v23 = vpop.permute.xlu0 %22
    %vm24 = vcmp.eq.s32.totalorder %v20, %v17
    %vm25 = vcmp.eq.s32.totalorder %v23, %v17
    %v26 = vsel %vm24, 1, 0
    %v27 = vsel %vm25, 1, 0
    %v28 = vcvt.s32.f32 %v26
    %v29 = vcvt.s32.f32 %v27
    %v30 = vld [vmem:[%s2] sm:$0xff]
    %v31 = vld [vmem:[%s2 + $0x8] sm:$0xff]
    %vm32 = vcmask 130048
    %v34 = vsel %vm32, %v28, 0
    %v37 = vsel %vm32, %v29, 0
    %39 = vmatprep.subr.mxu0 0.0
    %40 = vmatpush1.msra.mxu0 %v30
    %41 = vmatprep.subr.mxu0 0.0
    %42 = vmatpush1.msra.mxu0 %v31
    %43 = vmatprep.subr.mxu0 0.0
    %44 = vmatpush1.msra.mxu0 0.0
    %45 = vmatprep.subr.mxu0 0.0
    %46 = vmatpush1.msra.mxu0 0.0
    %47 = vmatprep.subr.mxu0 0.0
    %48 = vmatpush1.msra.mxu0 0.0
    %49 = vmatprep.subr.mxu0 0.0
    %50 = vmatpush1.msra.mxu0 0.0
    %51 = vmatprep.subr.mxu0 0.0
    %52 = vmatpush1.msra.mxu0 0.0
    %53 = vmatprep.subr.mxu0 0.0
    %54 = vmatpush1.msra.mxu0 0.0
    %55 = vmatprep.subr.mxu0 0.0
    %56 = vmatpush1.msra.mxu0 0.0
    %57 = vmatprep.subr.mxu0 0.0
    %58 = vmatpush1.msra.mxu0 0.0
    %59 = vmatprep.subr.mxu0 0.0
    %60 = vmatpush1.msra.mxu0 0.0
    %61 = vmatprep.subr.mxu0 0.0
    %62 = vmatpush1.msra.mxu0 0.0
    %63 = vmatprep.subr.mxu0 0.0
    %64 = vmatpush1.msra.mxu0 0.0
    %65 = vmatprep.subr.mxu0 0.0
    %66 = vmatpush1.msra.mxu0 0.0
    %67 = vmatprep.subr.mxu0 0.0
    %68 = vmatpush1.msra.mxu0 0.0
    %69 = vmatprep.subr.mxu0 0.0
    %70 = vmatpush1.msra.mxu0 0.0
    %71 = vmatprep.subr.mxu0 0.0
    %72 = vmatpush1.msra.mxu0 0.0
    %73 = vmatprep.subr.mxu0 0.0
    %74 = vmatpush1.msra.mxu0 0.0
    %75 = vmatprep.subr.mxu0 0.0
    %76 = vmatpush1.msra.mxu0 0.0
    %77 = vmatprep.subr.mxu0 0.0
    %78 = vmatpush1.msra.mxu0 0.0
    %79 = vmatprep.subr.mxu0 0.0
    %80 = vmatpush1.msra.mxu0 0.0
    %81 = vmatprep.subr.mxu0 0.0
    %82 = vmatpush1.msra.mxu0 0.0
    %83 = vmatprep.subr.mxu0 0.0
    %84 = vmatpush1.msra.mxu0 0.0
    %85 = vmatprep.subr.mxu0 0.0
    %86 = vmatpush1.msra.mxu0 0.0
    %87 = vmatprep.subr.mxu0 0.0
    %88 = vmatpush1.msra.mxu0 0.0
    %89 = vmatprep.subr.mxu0 0.0
    %90 = vmatpush1.msra.mxu0 0.0
    %91 = vmatprep.subr.mxu0 0.0
    %92 = vmatpush1.msra.mxu0 0.0
    %93 = vmatprep.subr.mxu0 0.0
    %94 = vmatpush1.msra.mxu0 0.0
    %95 = vmatprep.subr.mxu0 0.0
    %96 = vmatpush1.msra.mxu0 0.0
    %97 = vmatprep.subr.mxu0 0.0
    %98 = vmatpush1.msra.mxu0 0.0
    %99 = vmatprep.subr.mxu0 0.0
    %100 = vmatpush1.msra.mxu0 0.0
    %101 = vmatprep.subr.mxu0 0.0
    %102 = vmatpush1.msra.mxu0 0.0
    %103 = vmatprep.mubr.f32.mxu0 0.0
    %104 = vmatmul.mubr.f32.gmra.mrb[0].mxu0 %v34
    %v105 = vpop.f32.mrb[0].mxu0
    %v106 = vadd.f32 0.0, %v105
    %v107 = vpop.f32.mrb[0].mxu0
    %108 = vmatprep.mubr.f32.mxu0 0.0
    %109 = vmatmul.mubr.f32.gmra.mrb[0].mxu0 %v37
    %v110 = vpop.f32.mrb[0].mxu0
    %v111 = vadd.f32 0.0, %v110
    %v112 = vpop.f32.mrb[0].mxu0
    %113 = vdwg.mxu0
    %s114 = sld [smem:[#allocation3]]
    %s115 = smul.u32 0, 16
    %v116 = vlaneseq
    %v117 = vshrl.u32 %v116, 7
    %v118 = vadd.s32 %v117, 8
    %v119 = vstv %s115
    %v120 = vadd.s32 %v117, %v119
    %v121 = vadd.s32 %v118, %v119
    %v122 = vmul.u32 %v120, 128
    %v123 = vmul.u32 %v121, 128
    %v124 = vadd.s32 %v122, %v17
    %v125 = vadd.s32 %v123, %v17
    %s126 = smul.u32 %s114, 2654435761
    %v127 = vstv %s126
    %v128 = vxor.u32 %v124, %v127
    %v129 = vxor.u32 %v125, %v127
    %v130 = vshrl.u32 %v128, 16
    %v131 = vshrl.u32 %v129, 16
    %v132 = vxor.u32 %v128, %v130
    %v133 = vxor.u32 %v129, %v131
    %v134 = vmul.u32 %v132, 2246822507
    %v135 = vmul.u32 %v133, 2246822507
    %v136 = vshrl.u32 %v134, 13
    %v137 = vshrl.u32 %v135, 13
    %v138 = vxor.u32 %v134, %v136
    %v139 = vxor.u32 %v135, %v137
    %v140 = vmul.u32 %v138, 3266489909
    %v141 = vmul.u32 %v139, 3266489909
    %v142 = vshrl.u32 %v140, 16
    %v143 = vshrl.u32 %v141, 16
    %v144 = vxor.u32 %v140, %v142
    %v145 = vxor.u32 %v141, %v143
    %v146 = vshrl.u32 %v144, 8
    %v147 = vshrl.u32 %v145, 8
    %vm148 = vcmp.ge.s32.totalorder %v146, 1677722
    %vm149 = vcmp.ge.s32.totalorder %v147, 1677722
    %v150 = vmul.f32 %v106, 1.1111112
    %v151 = vmul.f32 %v111, 1.1111112
    %v152 = vsel %vm148, %v150, 0.0
    %v153 = vsel %vm149, %v151, 0.0
    %154 = vst [vmem:[#allocation4] sm:$0xff] %v152
    %155 = vst [vmem:[#allocation4 + $0x8] sm:$0xff] %v153
    // Predicated region
    $region10: #{tpu_custom_call.1} parent=1 // pred_check
      _
    $region11: #{tpu_custom_call.1} parent=1 // pred_check_branch
      %157 = sbr.rel (0) target = $region13
    $region12: #{tpu_custom_call.1} parent=1 // pred_region
      %s159 = ssub.s32 256, 256
      %160 = vsyncadd [#allocation5], %s159
      %s161 = sshll.u32 [#allocation4], 4
      %s162 = int_to_ptr.vmem [resolvable:$true] %s161
      %167 = dma.vmem_to_hbm [thread:$0]  %s162, 256, %s3, [#allocation5], 128, 128, 8
    $region13: #{tpu_custom_call.1} parent=1 // pred_fallthru
      _
    // Predicated region
    $region14: #{tpu_custom_call.1} parent=1 // pred_check
      _
    $region15: #{tpu_custom_call.1} parent=1 // pred_check_branch
      %169 = sbr.rel (0) target = $region17
    $region16: #{tpu_custom_call.1} parent=1 // pred_region
      %170 = dma.done [#allocation5], 256
    $region17: #{tpu_custom_call.1} parent=1 // pred_fallthru
      _
    %171 = vsyncpa [#allocation5], 1

</llo_original>
